<compile_context>
chip_gen: v7x
topology: tpu7x:2x2x1
jax: 0.10.0
libtpu: 0.0.40
codegen_flags: <defaults>
</compile_context>

<pallas_src>
import functools

import jax
import jax.numpy as jnp
from jax.experimental import pallas as pl
from jax.experimental.pallas import tpu as pltpu


# --------------------------------------------------------------------------
# small helpers
# --------------------------------------------------------------------------
def _round_up(x, m):
    return (x + m - 1) // m * m


def _device_kind():
    try:
        return jax.devices()[0].device_kind.lower()
    except Exception:
        return ""


def _vmem_limit_bytes():
    kind = _device_kind()
    if "v5" in kind or "v6" in kind:
        return 96 * 1024 * 1024          # 128 MiB physical VMEM on v5e/v6e
    return 48 * 1024 * 1024              # v7x (64 MiB / TC) and unknown chips


def _exp_dtype():
    # bf16 exp roughly doubles EUP throughput on v6e/v7x; older chips (v5e
    # and earlier) have no bf16 VPU/EUP path, keep f32 there.
    kind = _device_kind()
    if any(g in kind for g in ("v2", "v3", "v4", "v5")):
        return jnp.float32
    return jnp.bfloat16


def _choose_tiles(n):
    """(tm, ts, n_pad): dst-row tile, src-col tile, padded node count.

    Sized against a ~40 MiB scoped-VMEM budget: even at (512, 1024) the
    per-step working set (int8 adj block, bf16 z block, f32 accumulator and
    elementwise temps) is only a few MiB, so tiles are as large as the padded
    graph allows while keeping O(N^2) adjacency padding modest.  Tiles always
    divide n_pad.
    """
    n_pad = _round_up(max(n, 1), 128)
    if n_pad >= 2048:
        n_pad = _round_up(n, 512)        # unlock 512 / 1024 tiles on big graphs

    def _largest_tile(cap):
        t = 128
        for cand in (256, 512, 1024):
            if cand <= cap and n_pad % cand == 0:
                t = cand
        return t

    return _largest_tile(512), _largest_tile(1024), n_pad


# --------------------------------------------------------------------------
# projection kernel: one bf16 MXU pass  zfull = x @ [W | W@AL | W@AR]
# emitting z (bf16), el (f32 src scores), er (f32 dst scores) directly.
# --------------------------------------------------------------------------
def _proj_kernel(x_ref, w_ref, z_ref, el_ref, er_ref, *, hf, num_heads):
    zf = jnp.dot(x_ref[...], w_ref[...], preferred_element_type=jnp.float32)
    z_ref[...] = zf[:, :hf].astype(jnp.bfloat16)
    el_ref[...] = zf[:, hf:hf + num_heads]
    er_ref[...] = zf[:, hf + num_heads:hf + 2 * num_heads]


def _project(x_bf16, w_cat_bf16, *, hf, num_heads, tile_rows):
    n_pad, din = x_bf16.shape
    cols = w_cat_bf16.shape[1]
    kern = functools.partial(_proj_kernel, hf=hf, num_heads=num_heads)
    return pl.pallas_call(
        kern,
        out_shape=(
            jax.ShapeDtypeStruct((n_pad, hf), jnp.bfloat16),         # z
            jax.ShapeDtypeStruct((n_pad, num_heads), jnp.float32),   # el (src)
            jax.ShapeDtypeStruct((n_pad, num_heads), jnp.float32),   # er (dst)
        ),
        grid=(n_pad // tile_rows,),
        in_specs=[
            pl.BlockSpec((tile_rows, din), lambda i: (i, 0)),
            pl.BlockSpec((din, cols), lambda i: (0, 0)),
        ],
        out_specs=[
            pl.BlockSpec((tile_rows, hf), lambda i: (i, 0)),
            pl.BlockSpec((tile_rows, num_heads), lambda i: (i, 0)),
            pl.BlockSpec((tile_rows, num_heads), lambda i: (i, 0)),
        ],
        compiler_params=pltpu.CompilerParams(
            dimension_semantics=("parallel",)),
    )(x_bf16, w_cat_bf16)


# --------------------------------------------------------------------------
# attention + aggregation kernel (flash-style online softmax over src tiles)
# --------------------------------------------------------------------------
def _gat_attn_kernel(er_ref, elT_ref, z_ref, adj_ref, b_ref, out_ref,
                     m_sc, l_sc, acc_sc,
                     *, num_heads, out_feats, neg_slope, mean_heads,
                     ts, z_resident, exp_dtype):
    j = pl.program_id(1)
    H, F = num_heads, out_feats

    @pl.when(j == 0)
    def _():
        m_sc[...] = jnp.full_like(m_sc, -1e30)
        l_sc[...] = jnp.zeros_like(l_sc)
        acc_sc[...] = jnp.zeros_like(acc_sc)

    mask = adj_ref[...] > 0                 # (TM, TS) from int8 {0, 1}
    er_all = er_ref[...]                    # (TM, H)  destination scores (f32)
    el_all = elT_ref[...]                   # (H, TS)  source scores (f32)
    m_old = m_sc[...]                       # (TM, H)  running max (loaded once)
    l_old = l_sc[...]                       # (TM, H)  running sum (loaded once)
    head_lane = jax.lax.broadcasted_iota(jnp.int32, m_old.shape, 1)

    if z_resident:
        src0 = pl.multiple_of(j * ts, ts)   # src-tile offset into resident z

    m_all, l_all = m_old, l_old
    for h in range(H):
        e = er_all[:, h:h + 1] + el_all[h:h + 1, :]          # (TM, TS) f32
        if 0.0 < neg_slope < 1.0:
            e = jnp.maximum(e, neg_slope * e)                # leaky relu
        else:
            e = jnp.where(e > 0, e, neg_slope * e)
        # Masked scores: the running max must ignore non-edges, otherwise a
        # large non-edge score underflows every edge probability of the row.
        e = jnp.where(mask, e, -1e30)

        m_old_h = m_old[:, h:h + 1]
        m_new = jnp.maximum(m_old_h, jnp.max(e, axis=-1, keepdims=True))
        corr = jnp.exp(m_old_h - m_new)                      # (TM, 1) f32
        p = jnp.exp((e - m_new).astype(exp_dtype))           # (TM, TS)
        p = jnp.where(mask, p, 0.0)         # exact zeros off-edge / padded rows

        l_new = corr * l_old[:, h:h + 1] + jnp.sum(
            p.astype(jnp.float32), axis=-1, keepdims=True)
        m_all = jnp.where(head_lane == h, m_new, m_all)
        l_all = jnp.where(head_lane == h, l_new, l_all)

        if z_resident:
            zh = z_ref[pl.ds(src0, ts), pl.ds(h * F, F)]     # (TS, F) bf16
        else:
            zh = z_ref[:, pl.ds(h * F, F)]                   # (TS, F) bf16
        acc_sc[:, h * F:(h + 1) * F] = (
            corr * acc_sc[:, h * F:(h + 1) * F]
            + jnp.dot(p.astype(jnp.bfloat16), zh,
                      preferred_element_type=jnp.float32))

    m_sc[...] = m_all                       # written back once per grid step
    l_sc[...] = l_all

    @pl.when(j == pl.num_programs(1) - 1)
    def _():
        b = b_ref[...]                                       # (H, F)
        inv = pl.reciprocal(jnp.maximum(l_all, 1e-20), approx=True)  # (TM, H)
        if mean_heads:
            # last layer: relu(mean_over_heads(agg_h + b_h))
            out = None
            for h in range(H):
                t = (acc_sc[:, h * F:(h + 1) * F] * inv[:, h:h + 1]
                     + b[h:h + 1, :])
                out = t if out is None else out + t
            out_ref[...] = jnp.maximum(out * (1.0 / H), 0.0).astype(out_ref.dtype)
        else:
            # hidden layer: relu(agg_h + b_h), heads packed head-major
            for h in range(H):
                out_ref[:, h * F:(h + 1) * F] = jnp.maximum(
                    acc_sc[:, h * F:(h + 1) * F] * inv[:, h:h + 1]
                    + b[h:h + 1, :], 0.0).astype(out_ref.dtype)


def _attention(er, elT, z_bf16, adj_pad, bias, *, num_heads, out_feats,
               neg_slope, mean_heads, tm, ts, out_dtype):
    n_pad = adj_pad.shape[0]
    hf = num_heads * out_feats
    out_cols = out_feats if mean_heads else hf

    # Keep z fully VMEM-resident across the src (reduction) axis when it fits
    # (budget includes the pipeline's second buffer); otherwise stream it per
    # src tile with a 3-deep pipeline (z is the bigger per-step DMA when
    # hf > tm, adj keeps the default 2 buffers).
    z_resident = (2 * n_pad * hf * 2) <= (12 * 1024 * 1024)
    if z_resident:
        z_spec = pl.BlockSpec((n_pad, hf), lambda i, j: (0, 0))
    else:
        z_spec = pl.BlockSpec((ts, hf), lambda i, j: (j, 0),
                              pipeline_mode=pl.Buffered(3))

    kern = functools.partial(
        _gat_attn_kernel, num_heads=num_heads, out_feats=out_feats,
        neg_slope=neg_slope, mean_heads=mean_heads, ts=ts,
        z_resident=z_resident, exp_dtype=_exp_dtype())

    return pl.pallas_call(
        kern,
        out_shape=jax.ShapeDtypeStruct((n_pad, out_cols), out_dtype),
        grid=(n_pad // tm, n_pad // ts),
        in_specs=[
            pl.BlockSpec((tm, num_heads), lambda i, j: (i, 0)),          # er
            pl.BlockSpec((num_heads, ts), lambda i, j: (0, j)),          # el^T
            z_spec,                                                      # z bf16
            pl.BlockSpec((tm, ts), lambda i, j: (i, j)),                 # adj int8
            pl.BlockSpec((num_heads, out_feats), lambda i, j: (0, 0)),   # bias
        ],
        out_specs=pl.BlockSpec((tm, out_cols), lambda i, j: (i, 0)),
        scratch_shapes=[
            pltpu.VMEM((tm, num_heads), jnp.float32),    # running max
            pltpu.VMEM((tm, num_heads), jnp.float32),    # running sum
            pltpu.VMEM((tm, hf), jnp.float32),           # output accumulator
        ],
        compiler_params=pltpu.CompilerParams(
            dimension_semantics=("parallel", "arbitrary"),
            vmem_limit_bytes=_vmem_limit_bytes()),
    )(er, elT, z_bf16, adj_pad, bias)


# --------------------------------------------------------------------------
# layer / model wrappers
# --------------------------------------------------------------------------
def _attn_mixing_matrix(a):
    """(H, F) attention vector -> (H*F, H) block-diagonal mixing matrix."""
    H, F = a.shape
    eye = jnp.eye(H, dtype=a.dtype)
    return (a[:, :, None] * eye[:, None, :]).reshape(H * F, H)


def gat_conv(x_pad, w, attn_l, attn_r, bias, adj_pad, *, num_heads, out_feats,
             neg_slope=0.2, mean_heads=False, tm=128, ts=128,
             out_dtype=jnp.float32):
    """One GATConv layer on padded node features, fused ReLU epilogue.

    mean_heads=False: relu(GATConv(x)).flatten(1)   -> (n_pad, H*F)
    mean_heads=True : relu(GATConv(x).mean(heads))  -> (n_pad, F)
    """
    hf = num_heads * out_feats

    # Projection + per-head scores in one bf16 MXU pass:
    #   z = x @ W,  el = x @ (W @ AL)  (source),  er = x @ (W @ AR)  (dest)
    w_cat = jnp.concatenate(
        [w, w @ _attn_mixing_matrix(attn_l), w @ _attn_mixing_matrix(attn_r)],
        axis=1).astype(jnp.bfloat16)                      # (Din, H*F + 2H)
    z, el, er = _project(x_pad.astype(jnp.bfloat16), w_cat,
                         hf=hf, num_heads=num_heads, tile_rows=tm)
    elT = jnp.transpose(el)          # (H, n_pad); tiny, lane-major for the kernel

    return _attention(er, elT, z, adj_pad, bias,
                      num_heads=num_heads, out_feats=out_feats,
                      neg_slope=neg_slope, mean_heads=mean_heads,
                      tm=tm, ts=ts, out_dtype=out_dtype)


def gat_forward(adj, h, params, neg_slope):
    """Mirrors GAT.forward with attn=False (ReLU / flatten / head-mean fused)."""
    N = h.shape[0]
    tm, ts, n_pad = _choose_tiles(N)

    # Pad + cast the adjacency ONCE for the whole forward pass; int8 halves
    # the dominant O(N^2) HBM stream relative to bf16.
    adj_pad = jnp.zeros((n_pad, n_pad), jnp.int8).at[:N, :N].set(
        (adj > 0).astype(jnp.int8))
    # Features stay padded (and bf16 between layers); padded rows never reach
    # real rows because their adjacency columns are all zero.
    h_pad = jnp.zeros((n_pad, h.shape[1]), h.dtype).at[:N].set(h)

    for p in params[:-1]:
        h_pad = gat_conv(h_pad, p["w"], p["al"], p["ar"], p["b"], adj_pad,
                         num_heads=p["H"], out_feats=p["F"],
                         neg_slope=neg_slope, mean_heads=False,
                         tm=tm, ts=ts, out_dtype=jnp.bfloat16)
    p = params[-1]
    out_pad = gat_conv(h_pad, p["w"], p["al"], p["ar"], p["b"], adj_pad,
                       num_heads=p["H"], out_feats=p["F"],
                       neg_slope=neg_slope, mean_heads=True,
                       tm=tm, ts=ts, out_dtype=jnp.float32)
    return out_pad[:N]


if __name__ == "__main__":
    key = jax.random.PRNGKey(0)

    # Small GAT: n_layers=2, n_heads_list=[2] -> [2, 2]
    N = 16
    in_dim, hid_dim, out_dim = 8, 16, 4
    n_heads_list = [2, 2]
    neg_slope = 0.2

    k_adj, k_x, k_p = jax.random.split(key, 3)

    # Random directed graph + self-loops (every node has >=1 incoming edge).
    adj = (jax.random.uniform(k_adj, (N, N)) < 0.3).astype(jnp.float32)
    adj = jnp.maximum(adj, jnp.eye(N, dtype=jnp.float32))

    x = jax.random.normal(k_x, (N, in_dim), dtype=jnp.float32)

    # Layer shapes exactly as GAT.__init__ builds them (n_layers=2 branch):
    #   layer0: GATConv(in_dim,             hid_dim, heads[0])
    #   layer1: GATConv(hid_dim * heads[0], out_dim, heads[1])
    layer_dims = [
        (in_dim, hid_dim, n_heads_list[0]),
        (hid_dim * n_heads_list[0], out_dim, n_heads_list[1]),
    ]

    params = []
    for (di, do, H) in layer_dims:
        kw, kl, kr, k_p = jax.random.split(k_p, 4)
        params.append(dict(
            w=jax.random.normal(kw, (di, H * do), jnp.float32)
              * (2.0 / (di + H * do)) ** 0.5,                       # fc weight
            al=jax.random.normal(kl, (H, do), jnp.float32) * 0.1,   # attn_l
            ar=jax.random.normal(kr, (H, do), jnp.float32) * 0.1,   # attn_r
            b=jnp.zeros((H, do), jnp.float32),                      # bias
            H=H, F=do,
        ))

    out = gat_forward(adj, x, params, neg_slope)
    out = jax.block_until_ready(out)
    assert out.shape == (N, out_dim), out.shape
    assert bool(jnp.all(jnp.isfinite(out)))
    print("KERNEL_OK")
</pallas_src>

<mosaic_0001>
module attributes {stable_mosaic.version = 11 : i64} {
  func.func @_proj_kernel(%arg0: i32, %arg1: memref<128x8xbf16, #tpu.memory_space<vmem>>, %arg2: memref<8x36xbf16, #tpu.memory_space<vmem>>, %arg3: memref<128x32xbf16, #tpu.memory_space<vmem>>, %arg4: memref<128x2xf32, #tpu.memory_space<vmem>>, %arg5: memref<128x2xf32, #tpu.memory_space<vmem>>) attributes {dimension_semantics = [#tpu.dimension_semantics<parallel>], iteration_bounds = array<i64: 1>, scalar_prefetch = 0 : i64, scratch_operands = 0 : i64, tpu.core_type = #tpu.core_type<tc>, window_params = [{transform_indices = @transform_0, window_bounds = array<i64: 128, 8>}, {pipeline_mode = #tpu.pipeline_mode<synchronous>, transform_indices = @transform_1, window_bounds = array<i64: 8, 36>}, {transform_indices = @transform_2, window_bounds = array<i64: 128, 32>}, {transform_indices = @transform_3, window_bounds = array<i64: 128, 2>}, {transform_indices = @transform_4, window_bounds = array<i64: 128, 2>}]} {
    %c0 = arith.constant 0 : index
    %c0_0 = arith.constant 0 : index
    %0 = vector.load %arg1[%c0, %c0_0] : memref<128x8xbf16, #tpu.memory_space<vmem>>, vector<128x8xbf16>
    %c0_1 = arith.constant 0 : index
    %c0_2 = arith.constant 0 : index
    %1 = vector.load %arg2[%c0_1, %c0_2] : memref<8x36xbf16, #tpu.memory_space<vmem>>, vector<8x36xbf16>
    %cst = arith.constant dense<0.000000e+00> : vector<128x36xf32>
    %2 = tpu.matmul %0, %1, %cst {dimension_numbers = #tpu.dot_dimension_numbers<[1], [0], [0], [1], [0, 0, 1, 1], [], []>} : vector<128x8xbf16>, vector<8x36xbf16>, vector<128x36xf32> -> vector<128x36xf32>
    %3 = vector.extract_strided_slice %2 {offsets = [0, 0], sizes = [128, 32], strides = [1, 1]} : vector<128x36xf32> to vector<128x32xf32>
    %4 = arith.truncf %3 : vector<128x32xf32> to vector<128x32xbf16>
    %c0_3 = arith.constant 0 : index
    %c0_4 = arith.constant 0 : index
    %5 = vector.load %arg3[%c0_3, %c0_4] : memref<128x32xbf16, #tpu.memory_space<vmem>>, vector<128x32xbf16>
    tpu.vector_store %arg3[%c0_3, %c0_4], %4 {strides = array<i32>} : memref<128x32xbf16, #tpu.memory_space<vmem>>, vector<128x32xbf16>,
    %6 = vector.extract_strided_slice %2 {offsets = [0, 32], sizes = [128, 2], strides = [1, 1]} : vector<128x36xf32> to vector<128x2xf32>
    %c0_5 = arith.constant 0 : index
    %c0_6 = arith.constant 0 : index
    %7 = vector.load %arg4[%c0_5, %c0_6] : memref<128x2xf32, #tpu.memory_space<vmem>>, vector<128x2xf32>
    tpu.vector_store %arg4[%c0_5, %c0_6], %6 {strides = array<i32>} : memref<128x2xf32, #tpu.memory_space<vmem>>, vector<128x2xf32>,
    %8 = vector.extract_strided_slice %2 {offsets = [0, 34], sizes = [128, 2], strides = [1, 1]} : vector<128x36xf32> to vector<128x2xf32>
    %c0_7 = arith.constant 0 : index
    %c0_8 = arith.constant 0 : index
    %9 = vector.load %arg5[%c0_7, %c0_8] : memref<128x2xf32, #tpu.memory_space<vmem>>, vector<128x2xf32>
    tpu.vector_store %arg5[%c0_7, %c0_8], %8 {strides = array<i32>} : memref<128x2xf32, #tpu.memory_space<vmem>>, vector<128x2xf32>,
    return
  }
  func.func @transform_0(%arg0: i32) -> (i32, i32) {
    %c0_i32 = arith.constant 0 : i32
    %c0_i32_0 = arith.constant 0 : i32
    return %arg0, %c0_i32 : i32, i32
  }
  func.func @transform_1(%arg0: i32) -> (i32, i32) {
    %c0_i32 = arith.constant 0 : i32
    %c0_i32_0 = arith.constant 0 : i32
    %c0_i32_1 = arith.constant 0 : i32
    return %c0_i32, %c0_i32_0 : i32, i32
  }
  func.func @transform_2(%arg0: i32) -> (i32, i32) {
    %c0_i32 = arith.constant 0 : i32
    %c0_i32_0 = arith.constant 0 : i32
    return %arg0, %c0_i32 : i32, i32
  }
  func.func @transform_3(%arg0: i32) -> (i32, i32) {
    %c0_i32 = arith.constant 0 : i32
    %c0_i32_0 = arith.constant 0 : i32
    return %arg0, %c0_i32 : i32, i32
  }
  func.func @transform_4(%arg0: i32) -> (i32, i32) {
    %c0_i32 = arith.constant 0 : i32
    %c0_i32_0 = arith.constant 0 : i32
    return %arg0, %c0_i32 : i32, i32
  }
}

</mosaic_0001>

<llo_original>
// kernel: tpu_custom_call.1
$region0: #{tpu_custom_call.1}
  #allocation0 [shape = 'u32[]', space=smem, size = 0x4, offset = 0x4, fixed_abs, tag = 'smem constant byte address 0x4 - core index']
  #allocation1 [shape = 'u32[144,128]{1,0:T(1,128)}', space=vmem, size = 0x12000, scoped, tag = 'internal scratch']
  %s0 = inlined_call_operand.vmem [shape: bf16[128,8], index: 0, kind: input, shape index: {}]
  %s1 = inlined_call_operand.vmem [shape: bf16[8,36], index: 1, kind: input, shape index: {}]
  %s2 = inlined_call_operand.vmem [shape: bf16[128,32], index: 2, kind: output, shape index: {0}]
  %s3 = inlined_call_operand.vmem [shape: f32[128,2], index: 3, kind: output, shape index: {1}]
  %s4 = inlined_call_operand.vmem [shape: f32[128,2], index: 4, kind: output, shape index: {2}]
  %5 = xla_tuple %s2, %s3, %s4
  %s6 = sld [smem:[#allocation0]]
  $region34: #{tpu_custom_call.1} parent=0
    _
  %s8 = ssub.s32 1, %s6
  %s9 = scalar_select 0, %s8, %s6
  // Predicated region
  $region2: #{tpu_custom_call.1} parent=0 // pred_check
    _
  $region3: #{tpu_custom_call.1} parent=0 // pred_check_branch
    %11 = sbr.rel (0) target = $region5
  $region4: #{tpu_custom_call.1} parent=0 // pred_region
    _
  $region5: #{tpu_custom_call.1} parent=0 // pred_fallthru
    _
  // Predicated region
  $region6: #{tpu_custom_call.1} parent=0 // pred_check
    _
  $region7: #{tpu_custom_call.1} parent=0 // pred_check_branch
    %13 = sbr.rel (0) target = $region9
  $region8: #{tpu_custom_call.1} parent=0 // pred_region
    _
  $region9: #{tpu_custom_call.1} parent=0 // pred_fallthru
    _
  %v15 = vld [vmem:[%s0] sm:$0xf]
  %v16 = vld [vmem:[%s0 + $0x4] sm:$0xf]
  %v17 = vld [vmem:[%s0 + $0x8] sm:$0xf]
  %v18 = vld [vmem:[%s0 + $0xc] sm:$0xf]
  %v19 = vld [vmem:[%s0 + $0x10] sm:$0xf]
  %v20 = vld [vmem:[%s0 + $0x14] sm:$0xf]
  %v21 = vld [vmem:[%s0 + $0x18] sm:$0xf]
  %v22 = vld [vmem:[%s0 + $0x1c] sm:$0xf]
  %v23 = vld [vmem:[%s0 + $0x20] sm:$0xf]
  %v24 = vld [vmem:[%s0 + $0x24] sm:$0xf]
  %v25 = vld [vmem:[%s0 + $0x28] sm:$0xf]
  %v26 = vld [vmem:[%s0 + $0x2c] sm:$0xf]
  %v27 = vld [vmem:[%s0 + $0x30] sm:$0xf]
  %v28 = vld [vmem:[%s0 + $0x34] sm:$0xf]
  %v29 = vld [vmem:[%s0 + $0x38] sm:$0xf]
  %v30 = vld [vmem:[%s0 + $0x3c] sm:$0xf]
  %v31 = vld [vmem:[%s1] sm:$0xf]
  %v48 = vunpack.c.l.b16 %v15
  %v49 = vunpack.c.l.b16 %v16
  %v50 = vunpack.c.l.b16 %v17
  %v51 = vunpack.c.l.b16 %v18
  %v52 = vunpack.c.l.b16 %v19
  %v53 = vunpack.c.l.b16 %v20
  %v54 = vunpack.c.l.b16 %v21
  %v55 = vunpack.c.l.b16 %v22
  %v56 = vunpack.c.l.b16 %v23
  %v57 = vunpack.c.l.b16 %v24
  %v58 = vunpack.c.l.b16 %v25
  %v59 = vunpack.c.l.b16 %v26
  %v60 = vunpack.c.l.b16 %v27
  %v61 = vunpack.c.l.b16 %v28
  %v62 = vunpack.c.l.b16 %v29
  %v63 = vunpack.c.l.b16 %v30
  %v64 = vpack.c.b16 %v49, %v48
  %v65 = vpack.c.b16 %v51, %v50
  %v66 = vpack.c.b16 %v53, %v52
  %v67 = vpack.c.b16 %v55, %v54
  %v68 = vpack.c.b16 %v57, %v56
  %v69 = vpack.c.b16 %v59, %v58
  %v70 = vpack.c.b16 %v61, %v60
  %v71 = vpack.c.b16 %v63, %v62
  %vm72 = vcmask 64512
  %v74 = vsel %vm72, %v64, 0
  %v77 = vsel %vm72, %v65, 0
  %v80 = vsel %vm72, %v66, 0
  %v83 = vsel %vm72, %v67, 0
  %v86 = vsel %vm72, %v68, 0
  %v89 = vsel %vm72, %v69, 0
  %v92 = vsel %vm72, %v70, 0
  %v95 = vsel %vm72, %v71, 0
  %vm97 = vcmask 1043456
  %v99 = vsel %vm97, %v31, 0
  %101 = vmatprep.subr.bf16.mxu0 0
  %102 = vmatpush1.bf16.msra.mxu0 %v99
  %103 = vmatprep.subr.bf16.mxu0 0
  %104 = vmatpush1.bf16.msra.mxu0 0
  %105 = vmatprep.subr.bf16.mxu0 0
  %106 = vmatpush1.bf16.msra.mxu0 0
  %107 = vmatprep.subr.bf16.mxu0 0
  %108 = vmatpush1.bf16.msra.mxu0 0
  %109 = vmatprep.subr.bf16.mxu0 0
  %110 = vmatpush1.bf16.msra.mxu0 0
  %111 = vmatprep.subr.bf16.mxu0 0
  %112 = vmatpush1.bf16.msra.mxu0 0
  %113 = vmatprep.subr.bf16.mxu0 0
  %114 = vmatpush1.bf16.msra.mxu0 0
  %115 = vmatprep.subr.bf16.mxu0 0
  %116 = vmatpush1.bf16.msra.mxu0 0
  %117 = vmatprep.subr.bf16.mxu0 0
  %118 = vmatpush1.bf16.msra.mxu0 0
  %119 = vmatprep.subr.bf16.mxu0 0
  %120 = vmatpush1.bf16.msra.mxu0 0
  %121 = vmatprep.subr.bf16.mxu0 0
  %122 = vmatpush1.bf16.msra.mxu0 0
  %123 = vmatprep.subr.bf16.mxu0 0
  %124 = vmatpush1.bf16.msra.mxu0 0
  %125 = vmatprep.subr.bf16.mxu0 0
  %126 = vmatpush1.bf16.msra.mxu0 0
  %127 = vmatprep.subr.bf16.mxu0 0
  %128 = vmatpush1.bf16.msra.mxu0 0
  %129 = vmatprep.subr.bf16.mxu0 0
  %130 = vmatpush1.bf16.msra.mxu0 0
  %131 = vmatprep.subr.bf16.mxu0 0
  %132 = vmatpush1.bf16.msra.mxu0 0
  %133 = vmatprep.mubr.bf16.mxu0 0
  %134 = vmatmul.mubr.bf16.gmra.mrb[0].mxu0 %v74
  %v135 = vpop.f32.mrb[0].mxu0
  %v136 = vadd.f32 0.0, %v135
  %v137 = vpop.f32.mrb[0].mxu0
  %v138 = vpop.f32.mrb[0].mxu0
  %v139 = vadd.f32 0.0, %v138
  %v140 = vpop.f32.mrb[0].mxu0
  %141 = vmatprep.mubr.bf16.mxu0 0
  %142 = vmatmul.mubr.bf16.gmra.mrb[0].mxu0 %v77
  %v143 = vpop.f32.mrb[0].mxu0
  %v144 = vadd.f32 0.0, %v143
  %v145 = vpop.f32.mrb[0].mxu0
  %v146 = vpop.f32.mrb[0].mxu0
  %v147 = vadd.f32 0.0, %v146
  %v148 = vpop.f32.mrb[0].mxu0
  %149 = vmatprep.mubr.bf16.mxu0 0
  %150 = vmatmul.mubr.bf16.gmra.mrb[0].mxu0 %v80
  %v151 = vpop.f32.mrb[0].mxu0
  %v152 = vadd.f32 0.0, %v151
  %v153 = vpop.f32.mrb[0].mxu0
  %v154 = vpop.f32.mrb[0].mxu0
  %v155 = vadd.f32 0.0, %v154
  %v156 = vpop.f32.mrb[0].mxu0
  %157 = vmatprep.mubr.bf16.mxu0 0
  %158 = vmatmul.mubr.bf16.gmra.mrb[0].mxu0 %v83
  %v159 = vpop.f32.mrb[0].mxu0
  %v160 = vadd.f32 0.0, %v159
  %v161 = vpop.f32.mrb[0].mxu0
  %v162 = vpop.f32.mrb[0].mxu0
  %v163 = vadd.f32 0.0, %v162
  %v164 = vpop.f32.mrb[0].mxu0
  %165 = vmatprep.mubr.bf16.mxu0 0
  %166 = vmatmul.mubr.bf16.gmra.mrb[0].mxu0 %v86
  %v167 = vpop.f32.mrb[0].mxu0
  %v168 = vadd.f32 0.0, %v167
  %v169 = vpop.f32.mrb[0].mxu0
  %v170 = vpop.f32.mrb[0].mxu0
  %v171 = vadd.f32 0.0, %v170
  %v172 = vpop.f32.mrb[0].mxu0
  %173 = vmatprep.mubr.bf16.mxu0 0
  %174 = vmatmul.mubr.bf16.gmra.mrb[0].mxu0 %v89
  %v175 = vpop.f32.mrb[0].mxu0
  %v176 = vadd.f32 0.0, %v175
  %v177 = vpop.f32.mrb[0].mxu0
  %v178 = vpop.f32.mrb[0].mxu0
  %v179 = vadd.f32 0.0, %v178
  %v180 = vpop.f32.mrb[0].mxu0
  %181 = vmatprep.mubr.bf16.mxu0 0
  %182 = vmatmul.mubr.bf16.gmra.mrb[0].mxu0 %v92
  %v183 = vpop.f32.mrb[0].mxu0
  %v184 = vadd.f32 0.0, %v183
  %v185 = vpop.f32.mrb[0].mxu0
  %v186 = vpop.f32.mrb[0].mxu0
  %v187 = vadd.f32 0.0, %v186
  %v188 = vpop.f32.mrb[0].mxu0
  %189 = vmatprep.mubr.bf16.mxu0 0
  %190 = vmatmul.mubr.bf16.gmra.mrb[0].mxu0 %v95
  %v191 = vpop.f32.mrb[0].mxu0
  %v192 = vadd.f32 0.0, %v191
  %v193 = vpop.f32.mrb[0].mxu0
  %v194 = vpop.f32.mrb[0].mxu0
  %v195 = vadd.f32 0.0, %v194
  %v196 = vpop.f32.mrb[0].mxu0
  %197 = vdwg.mxu0
  %v198 = vpack.c.bf16 %v139, %v136
  %v199 = vpack.c.bf16 %v147, %v144
  %v200 = vpack.c.bf16 %v155, %v152
  %v201 = vpack.c.bf16 %v163, %v160
  %v202 = vpack.c.bf16 %v171, %v168
  %v203 = vpack.c.bf16 %v179, %v176
  %v204 = vpack.c.bf16 %v187, %v184
  %v205 = vpack.c.bf16 %v195, %v192
  %v214 = vunpack.c.l.b16 %v198
  %v215 = vunpack.c.h.b16 %v198
  %v216 = vunpack.c.l.b16 %v199
  %v217 = vunpack.c.h.b16 %v199
  %v218 = vunpack.c.l.b16 %v200
  %v219 = vunpack.c.h.b16 %v200
  %v220 = vunpack.c.l.b16 %v201
  %v221 = vunpack.c.h.b16 %v201
  %v222 = vunpack.c.l.b16 %v202
  %v223 = vunpack.c.h.b16 %v202
  %v224 = vunpack.c.l.b16 %v203
  %v225 = vunpack.c.h.b16 %v203
  %v226 = vunpack.c.l.b16 %v204
  %v227 = vunpack.c.h.b16 %v204
  %v228 = vunpack.c.l.b16 %v205
  %v229 = vunpack.c.h.b16 %v205
  %v230 = vpack.c.b16 %v214, %v214
  %v231 = vpack.c.b16 %v215, %v215
  %v232 = vpack.c.b16 %v216, %v216
  %v233 = vpack.c.b16 %v217, %v217
  %v234 = vpack.c.b16 %v218, %v218
  %v235 = vpack.c.b16 %v219, %v219
  %v236 = vpack.c.b16 %v220, %v220
  %v237 = vpack.c.b16 %v221, %v221
  %v238 = vpack.c.b16 %v222, %v222
  %v239 = vpack.c.b16 %v223, %v223
  %v240 = vpack.c.b16 %v224, %v224
  %v241 = vpack.c.b16 %v225, %v225
  %v242 = vpack.c.b16 %v226, %v226
  %v243 = vpack.c.b16 %v227, %v227
  %v244 = vpack.c.b16 %v228, %v228
  %v245 = vpack.c.b16 %v229, %v229
  %vm262 = vcmask 257024
  %263 = vst.msk [vmem:[%s2] sm:$0xf] %vm262, %v230
  %264 = vst.msk [vmem:[%s2 + $0x4] sm:$0xf] %vm262, %v231
  %265 = vst.msk [vmem:[%s2 + $0x8] sm:$0xf] %vm262, %v232
  %266 = vst.msk [vmem:[%s2 + $0xc] sm:$0xf] %vm262, %v233
  %267 = vst.msk [vmem:[%s2 + $0x10] sm:$0xf] %vm262, %v234
  %268 = vst.msk [vmem:[%s2 + $0x14] sm:$0xf] %vm262, %v235
  %269 = vst.msk [vmem:[%s2 + $0x18] sm:$0xf] %vm262, %v236
  %270 = vst.msk [vmem:[%s2 + $0x1c] sm:$0xf] %vm262, %v237
  %271 = vst.msk [vmem:[%s2 + $0x20] sm:$0xf] %vm262, %v238
  %272 = vst.msk [vmem:[%s2 + $0x24] sm:$0xf] %vm262, %v239
  %273 = vst.msk [vmem:[%s2 + $0x28] sm:$0xf] %vm262, %v240
  %274 = vst.msk [vmem:[%s2 + $0x2c] sm:$0xf] %vm262, %v241
  %275 = vst.msk [vmem:[%s2 + $0x30] sm:$0xf] %vm262, %v242
  %276 = vst.msk [vmem:[%s2 + $0x34] sm:$0xf] %vm262, %v243
  %277 = vst.msk [vmem:[%s2 + $0x38] sm:$0xf] %vm262, %v244
  %278 = vst.msk [vmem:[%s2 + $0x3c] sm:$0xf] %vm262, %v245
  %295 = vrot.lane.b32.xlu0 %v136, 96
  %v296 = vpop.permute.xlu0 %295
  %297 = vrot.lane.b32.xlu0 %v139, 96
  %v298 = vpop.permute.xlu0 %297
  %299 = vrot.lane.b32.xlu0 %v144, 96
  %v300 = vpop.permute.xlu0 %299
  %301 = vrot.lane.b32.xlu0 %v147, 96
  %v302 = vpop.permute.xlu0 %301
  %303 = vrot.lane.b32.xlu0 %v152, 96
  %v304 = vpop.permute.xlu0 %303
  %305 = vrot.lane.b32.xlu0 %v155, 96
  %v306 = vpop.permute.xlu0 %305
  %307 = vrot.lane.b32.xlu0 %v160, 96
  %v308 = vpop.permute.xlu0 %307
  %309 = vrot.lane.b32.xlu0 %v163, 96
  %v310 = vpop.permute.xlu0 %309
  %311 = vrot.lane.b32.xlu0 %v168, 96
  %v312 = vpop.permute.xlu0 %311
  %313 = vrot.lane.b32.xlu0 %v171, 96
  %v314 = vpop.permute.xlu0 %313
  %315 = vrot.lane.b32.xlu0 %v176, 96
  %v316 = vpop.permute.xlu0 %315
  %317 = vrot.lane.b32.xlu0 %v179, 96
  %v318 = vpop.permute.xlu0 %317
  %319 = vrot.lane.b32.xlu0 %v184, 96
  %v320 = vpop.permute.xlu0 %319
  %321 = vrot.lane.b32.xlu0 %v187, 96
  %v322 = vpop.permute.xlu0 %321
  %323 = vrot.lane.b32.xlu0 %v192, 96
  %v324 = vpop.permute.xlu0 %323
  %325 = vrot.lane.b32.xlu0 %v195, 96
  %v326 = vpop.permute.xlu0 %325
  %vm343 = vcmask 15360
  %344 = vst.msk [vmem:[%s3] sm:$0xff] %vm343, %v296
  %345 = vst.msk [vmem:[%s3 + $0x8] sm:$0xff] %vm343, %v298
  %346 = vst.msk [vmem:[%s3 + $0x10] sm:$0xff] %vm343, %v300
  %347 = vst.msk [vmem:[%s3 + $0x18] sm:$0xff] %vm343, %v302
  %348 = vst.msk [vmem:[%s3 + $0x20] sm:$0xff] %vm343, %v304
  %349 = vst.msk [vmem:[%s3 + $0x28] sm:$0xff] %vm343, %v306
  %350 = vst.msk [vmem:[%s3 + $0x30] sm:$0xff] %vm343, %v308
  %351 = vst.msk [vmem:[%s3 + $0x38] sm:$0xff] %vm343, %v310
  %352 = vst.msk [vmem:[%s3 + $0x40] sm:$0xff] %vm343, %v312
  %353 = vst.msk [vmem:[%s3 + $0x48] sm:$0xff] %vm343, %v314
  %354 = vst.msk [vmem:[%s3 + $0x50] sm:$0xff] %vm343, %v316
  %355 = vst.msk [vmem:[%s3 + $0x58] sm:$0xff] %vm343, %v318
  %356 = vst.msk [vmem:[%s3 + $0x60] sm:$0xff] %vm343, %v320
  %357 = vst.msk [vmem:[%s3 + $0x68] sm:$0xff] %vm343, %v322
  %358 = vst.msk [vmem:[%s3 + $0x70] sm:$0xff] %vm343, %v324
  %359 = vst.msk [vmem:[%s3 + $0x78] sm:$0xff] %vm343, %v326
  %360 = vrot.lane.b32.xlu0 %v136, 94
  %v361 = vpop.permute.xlu0 %360
  %362 = vrot.lane.b32.xlu0 %v139, 94
  %v363 = vpop.permute.xlu0 %362
  %364 = vrot.lane.b32.xlu0 %v144, 94
  %v365 = vpop.permute.xlu0 %364
  %366 = vrot.lane.b32.xlu0 %v147, 94
  %v367 = vpop.permute.xlu0 %366
  %368 = vrot.lane.b32.xlu0 %v152, 94
  %v369 = vpop.permute.xlu0 %368
  %370 = vrot.lane.b32.xlu0 %v155, 94
  %v371 = vpop.permute.xlu0 %370
  %372 = vrot.lane.b32.xlu0 %v160, 94
  %v373 = vpop.permute.xlu0 %372
  %374 = vrot.lane.b32.xlu0 %v163, 94
  %v375 = vpop.permute.xlu0 %374
  %376 = vrot.lane.b32.xlu0 %v168, 94
  %v377 = vpop.permute.xlu0 %376
  %378 = vrot.lane.b32.xlu0 %v171, 94
  %v379 = vpop.permute.xlu0 %378
  %380 = vrot.lane.b32.xlu0 %v176, 94
  %v381 = vpop.permute.xlu0 %380
  %382 = vrot.lane.b32.xlu0 %v179, 94
  %v383 = vpop.permute.xlu0 %382
  %384 = vrot.lane.b32.xlu0 %v184, 94
  %v385 = vpop.permute.xlu0 %384
  %386 = vrot.lane.b32.xlu0 %v187, 94
  %v387 = vpop.permute.xlu0 %386
  %388 = vrot.lane.b32.xlu0 %v192, 94
  %v389 = vpop.permute.xlu0 %388
  %390 = vrot.lane.b32.xlu0 %v195, 94
  %v391 = vpop.permute.xlu0 %390
  %408 = vst.msk [vmem:[%s4] sm:$0xff] %vm343, %v361
  %409 = vst.msk [vmem:[%s4 + $0x8] sm:$0xff] %vm343, %v363
  %410 = vst.msk [vmem:[%s4 + $0x10] sm:$0xff] %vm343, %v365
  %411 = vst.msk [vmem:[%s4 + $0x18] sm:$0xff] %vm343, %v367
  %412 = vst.msk [vmem:[%s4 + $0x20] sm:$0xff] %vm343, %v369
  %413 = vst.msk [vmem:[%s4 + $0x28] sm:$0xff] %vm343, %v371
  %414 = vst.msk [vmem:[%s4 + $0x30] sm:$0xff] %vm343, %v373
  %415 = vst.msk [vmem:[%s4 + $0x38] sm:$0xff] %vm343, %v375
  %416 = vst.msk [vmem:[%s4 + $0x40] sm:$0xff] %vm343, %v377
  %417 = vst.msk [vmem:[%s4 + $0x48] sm:$0xff] %vm343, %v379
  %418 = vst.msk [vmem:[%s4 + $0x50] sm:$0xff] %vm343, %v381
  %419 = vst.msk [vmem:[%s4 + $0x58] sm:$0xff] %vm343, %v383
  %420 = vst.msk [vmem:[%s4 + $0x60] sm:$0xff] %vm343, %v385
  %421 = vst.msk [vmem:[%s4 + $0x68] sm:$0xff] %vm343, %v387
  %422 = vst.msk [vmem:[%s4 + $0x70] sm:$0xff] %vm343, %v389
  %423 = vst.msk [vmem:[%s4 + $0x78] sm:$0xff] %vm343, %v391
  // Predicated region
  $region10: #{tpu_custom_call.1} parent=0 // pred_check
    _
  $region11: #{tpu_custom_call.1} parent=0 // pred_check_branch
    %425 = sbr.rel (0) target = $region13
  $region12: #{tpu_custom_call.1} parent=0 // pred_region
    _
  $region13: #{tpu_custom_call.1} parent=0 // pred_fallthru
    _
  // Predicated region
  $region14: #{tpu_custom_call.1} parent=0 // pred_check
    _
  $region15: #{tpu_custom_call.1} parent=0 // pred_check_branch
    %427 = sbr.rel (0) target = $region17
  $region16: #{tpu_custom_call.1} parent=0 // pred_region
    _
  $region17: #{tpu_custom_call.1} parent=0 // pred_fallthru
    _
  // Predicated region
  $region18: #{tpu_custom_call.1} parent=0 // pred_check
    _
  $region19: #{tpu_custom_call.1} parent=0 // pred_check_branch
    %429 = sbr.rel (0) target = $region21
  $region20: #{tpu_custom_call.1} parent=0 // pred_region
    _
  $region21: #{tpu_custom_call.1} parent=0 // pred_fallthru
    _
  // Predicated region
  $region22: #{tpu_custom_call.1} parent=0 // pred_check
    _
  $region23: #{tpu_custom_call.1} parent=0 // pred_check_branch
    %431 = sbr.rel (0) target = $region25
  $region24: #{tpu_custom_call.1} parent=0 // pred_region
    _
  $region25: #{tpu_custom_call.1} parent=0 // pred_fallthru
    _
  // Predicated region
  $region26: #{tpu_custom_call.1} parent=0 // pred_check
    _
  $region27: #{tpu_custom_call.1} parent=0 // pred_check_branch
    %433 = sbr.rel (0) target = $region29
  $region28: #{tpu_custom_call.1} parent=0 // pred_region
    _
  $region29: #{tpu_custom_call.1} parent=0 // pred_fallthru
    _
  // Predicated region
  $region30: #{tpu_custom_call.1} parent=0 // pred_check
    _
  $region31: #{tpu_custom_call.1} parent=0 // pred_check_branch
    %435 = sbr.rel (0) target = $region33
  $region32: #{tpu_custom_call.1} parent=0 // pred_region
    _
  $region33: #{tpu_custom_call.1} parent=0 // pred_fallthru
    _

</llo_original>
